<compile_context>
chip_gen: v7x
topology: tpu7x:2x2x1
jax: 0.10.0
libtpu: 0.0.40
codegen_flags: <defaults>
</compile_context>

<pallas_src>
import functools

import jax
import jax.numpy as jnp
from jax import lax
from jax.experimental import pallas as pl
from jax.experimental.pallas import tpu as pltpu


_LANE = 128
_TM_MAX = 512     # row tile for the fused QKV projection
_TQ_MAX = 256     # q tile for flash attention (sized for v7x 64 MiB VMEM)
_TKV_MAX = 512    # kv tile for flash attention


def _round_up(x, m):
    return (x + m - 1) // m * m


# ---------------------------------------------------------------------------
# Kernel 1: fused QKV projection   y = x @ W_qkv + b_qkv,  split into Q, K, V
# ---------------------------------------------------------------------------
def _qkv_proj_kernel(x_ref, w_ref, b_ref, q_ref, k_ref, v_ref, *, hp):
    # x_ref: (tm, D_in)   w_ref: (D_in, 3*hp)   b_ref: (1, 3*hp)
    y = jnp.dot(x_ref[...], w_ref[...],
                preferred_element_type=jnp.float32) + b_ref[...]
    # Slices land on 128-lane boundaries (hp is a multiple of 128).
    q_ref[...] = y[:, :hp].astype(q_ref.dtype)
    k_ref[...] = y[:, hp:2 * hp].astype(k_ref.dtype)
    v_ref[...] = y[:, 2 * hp:].astype(v_ref.dtype)


def _qkv_projection(x2d, wqkv, bqkv, hp):
    m, d_in = x2d.shape
    tm = m if m <= _TM_MAX else _TM_MAX
    grid = (pl.cdiv(m, tm),)

    kernel = functools.partial(_qkv_proj_kernel, hp=hp)
    # NOTE: the weight/bias index_maps are constant, so Mosaic only fetches
    # them once across grid steps.  We intentionally keep the default
    # pipelining (instead of pl.Buffered(1)) for maximum compatibility; the
    # extra constant-block buffer only matters for very large D_in * H.
    return pl.pallas_call(
        kernel,
        out_shape=[jax.ShapeDtypeStruct((m, hp), jnp.float32)] * 3,
        grid_spec=pltpu.PrefetchScalarGridSpec(
            num_scalar_prefetch=0,
            grid=grid,
            in_specs=[
                pl.BlockSpec((tm, d_in), lambda i: (i, 0)),       # x row tile
                pl.BlockSpec((d_in, 3 * hp), lambda i: (0, 0)),   # fused W_qkv
                pl.BlockSpec((1, 3 * hp), lambda i: (0, 0)),      # fused bias
            ],
            out_specs=[
                pl.BlockSpec((tm, hp), lambda i: (i, 0)),         # Q
                pl.BlockSpec((tm, hp), lambda i: (i, 0)),         # K
                pl.BlockSpec((tm, hp), lambda i: (i, 0)),         # V
            ],
        ),
        compiler_params=pltpu.CompilerParams(
            dimension_semantics=("parallel",)),
    )(x2d, wqkv, bqkv)


# ---------------------------------------------------------------------------
# Kernel 2: flash attention (online softmax over kv tiles)
# ---------------------------------------------------------------------------
def _flash_attn_kernel(q_ref, k_ref, v_ref, o_ref,
                       m_sc, l_sc, acc_sc, *, inv_scale):
    ki = pl.program_id(2)

    @pl.when(ki == 0)
    def _():
        m_sc[...] = jnp.full_like(m_sc, -jnp.inf)
        l_sc[...] = jnp.zeros_like(l_sc)
        acc_sc[...] = jnp.zeros_like(acc_sc)

    q = q_ref[0]            # (tq, hp)
    k = k_ref[0]            # (tkv, hp)
    v = v_ref[0]            # (tkv, hp)

    # Scores: contract the hidden axis of both operands directly on the MXU,
    # no materialized K^T (avoids an XLU transpose / VMEM copy).
    s = lax.dot_general(q, k, (((1,), (1,)), ((), ())),
                        preferred_element_type=jnp.float32) * inv_scale

    m_prev = m_sc[...]
    m_new = jnp.maximum(m_prev, jnp.max(s, axis=-1, keepdims=True))
    alpha = jnp.exp(m_prev - m_new)
    p = jnp.exp(s - m_new)

    l_sc[...] = alpha * l_sc[...] + jnp.sum(p, axis=-1, keepdims=True)
    acc_sc[...] = alpha * acc_sc[...] + jnp.dot(
        p.astype(v.dtype), v, preferred_element_type=jnp.float32)
    m_sc[...] = m_new

    @pl.when(ki == pl.num_programs(2) - 1)
    def _():
        # Exact reciprocal keeps the tight f32 tolerance; approx=True would
        # move the divide onto the (otherwise idle) EUP at a tiny extra error.
        inv_l = pl.reciprocal(l_sc[...], approx=False)
        o_ref[0] = (acc_sc[...] * inv_l).astype(o_ref.dtype)


def _flash_attention(q, k, v, inv_scale):
    b, s, hp = q.shape
    tq = s if s <= _TQ_MAX else _TQ_MAX
    tkv = s if s <= _TKV_MAX else _TKV_MAX
    assert s % tq == 0 and s % tkv == 0, (
        "pad seq_len to a multiple of the attention tile size")
    grid = (b, s // tq, s // tkv)

    kernel = functools.partial(_flash_attn_kernel, inv_scale=inv_scale)
    return pl.pallas_call(
        kernel,
        out_shape=jax.ShapeDtypeStruct((b, s, hp), jnp.float32),
        grid_spec=pltpu.PrefetchScalarGridSpec(
            num_scalar_prefetch=0,
            grid=grid,
            in_specs=[
                pl.BlockSpec((1, tq, hp), lambda bi, qi, ki: (bi, qi, 0)),   # Q
                pl.BlockSpec((1, tkv, hp), lambda bi, qi, ki: (bi, ki, 0)),  # K
                pl.BlockSpec((1, tkv, hp), lambda bi, qi, ki: (bi, ki, 0)),  # V
            ],
            out_specs=pl.BlockSpec((1, tq, hp),
                                   lambda bi, qi, ki: (bi, qi, 0)),
            scratch_shapes=[
                pltpu.VMEM((tq, 1), jnp.float32),    # running max  m_i
                pltpu.VMEM((tq, 1), jnp.float32),    # running sum  l_i
                pltpu.VMEM((tq, hp), jnp.float32),   # output accumulator
            ],
        ),
        compiler_params=pltpu.CompilerParams(
            dimension_semantics=("parallel", "parallel", "arbitrary")),
    )(q, k, v)


# ---------------------------------------------------------------------------
# Public wrapper
# ---------------------------------------------------------------------------
def self_attention(x, wq, wk, wv, bq, bk, bv):
    """x: [B, S, D_in]; w*: [D_in, H] (pre-transposed nn.Linear weights);
    b*: [H].  Returns [B, S, H] float32, matching the PyTorch forward."""
    B, S, D_in = x.shape
    H = wq.shape[1]
    Hp = _round_up(H, _LANE)          # lane-dense hidden; pad columns are 0
    inv_scale = 1.0 / (float(H) ** 0.5)

    pad_w = lambda w: jnp.pad(w, ((0, 0), (0, Hp - H)))
    pad_b = lambda bvec: jnp.pad(bvec, (0, Hp - H))
    wqkv = jnp.concatenate([pad_w(wq), pad_w(wk), pad_w(wv)], axis=1)
    bqkv = jnp.concatenate(
        [pad_b(bq), pad_b(bk), pad_b(bv)]).reshape(1, 3 * Hp)

    # Projections are batch-independent: fold B into the matmul M dimension.
    x2d = x.reshape(B * S, D_in)
    q2d, k2d, v2d = _qkv_projection(x2d, wqkv, bqkv, Hp)
    q = q2d.reshape(B, S, Hp)
    k = k2d.reshape(B, S, Hp)
    v = v2d.reshape(B, S, Hp)

    out = _flash_attention(q, k, v, inv_scale)
    return out[..., :H]               # drop the zero lane-padding


def _reference(x, wq, wk, wv, bq, bk, bv):
    """Pure-JAX reference mirroring the PyTorch forward."""
    H = wq.shape[1]
    q = x @ wq + bq
    k = x @ wk + bk
    v = x @ wv + bv
    scores = (q @ jnp.swapaxes(k, -2, -1)) * (1.0 / (H ** 0.5))
    p = jax.nn.softmax(scores, axis=-1)
    return p @ v


if __name__ == "__main__":
    # Small shapes consistent with the module's forward contract.
    B, S, D_in, H = 2, 8, 32, 32

    key = jax.random.PRNGKey(0)
    kx, kq, kk, kv, kbq, kbk, kbv = jax.random.split(key, 7)

    x = jax.random.normal(kx, (B, S, D_in), dtype=jnp.float32)

    # Deterministic parameter init (nn.Linear shapes: W [H, D_in], b [H]);
    # kept as [D_in, H] (already transposed) for the kernels.
    bound = 1.0 / (D_in ** 0.5)
    wq = jax.random.uniform(kq, (D_in, H), jnp.float32, -bound, bound)
    wk = jax.random.uniform(kk, (D_in, H), jnp.float32, -bound, bound)
    wv = jax.random.uniform(kv, (D_in, H), jnp.float32, -bound, bound)
    bq = jax.random.uniform(kbq, (H,), jnp.float32, -bound, bound)
    bk = jax.random.uniform(kbk, (H,), jnp.float32, -bound, bound)
    bv = jax.random.uniform(kbv, (H,), jnp.float32, -bound, bound)

    out = self_attention(x, wq, wk, wv, bq, bk, bv)
    out = jax.block_until_ready(out)

    ref = _reference(x, wq, wk, wv, bq, bk, bv)
    assert out.shape == (B, S, H)
    assert jnp.allclose(out, ref, atol=1e-4, rtol=1e-4), "mismatch vs reference"

    print("KERNEL_OK")
</pallas_src>

<mosaic_0001>
module attributes {stable_mosaic.version = 11 : i64} {
  func.func @_qkv_proj_kernel(%arg0: i32, %arg1: memref<16x32xf32, #tpu.memory_space<vmem>>, %arg2: memref<32x384xf32, #tpu.memory_space<vmem>>, %arg3: memref<1x384xf32, #tpu.memory_space<vmem>>, %arg4: memref<16x128xf32, #tpu.memory_space<vmem>>, %arg5: memref<16x128xf32, #tpu.memory_space<vmem>>, %arg6: memref<16x128xf32, #tpu.memory_space<vmem>>) attributes {dimension_semantics = [#tpu.dimension_semantics<parallel>], iteration_bounds = array<i64: 1>, scalar_prefetch = 0 : i64, scratch_operands = 0 : i64, tpu.core_type = #tpu.core_type<tc>, window_params = [{transform_indices = @transform_0, window_bounds = array<i64: 16, 32>}, {pipeline_mode = #tpu.pipeline_mode<synchronous>, transform_indices = @transform_1, window_bounds = array<i64: 32, 384>}, {pipeline_mode = #tpu.pipeline_mode<synchronous>, transform_indices = @transform_2, window_bounds = array<i64: 1, 384>}, {transform_indices = @transform_3, window_bounds = array<i64: 16, 128>}, {transform_indices = @transform_4, window_bounds = array<i64: 16, 128>}, {transform_indices = @transform_5, window_bounds = array<i64: 16, 128>}]} {
    %c0 = arith.constant 0 : index
    %c0_0 = arith.constant 0 : index
    %0 = vector.load %arg1[%c0, %c0_0] : memref<16x32xf32, #tpu.memory_space<vmem>>, vector<16x32xf32>
    %c0_1 = arith.constant 0 : index
    %c0_2 = arith.constant 0 : index
    %1 = vector.load %arg2[%c0_1, %c0_2] : memref<32x384xf32, #tpu.memory_space<vmem>>, vector<32x384xf32>
    %cst = arith.constant dense<0.000000e+00> : vector<16x384xf32>
    %2 = tpu.matmul %0, %1, %cst {dimension_numbers = #tpu.dot_dimension_numbers<[1], [0], [0], [1], [0, 0, 1, 1], [], []>} : vector<16x32xf32>, vector<32x384xf32>, vector<16x384xf32> -> vector<16x384xf32>
    %c0_3 = arith.constant 0 : index
    %c0_4 = arith.constant 0 : index
    %3 = vector.load %arg3[%c0_3, %c0_4] : memref<1x384xf32, #tpu.memory_space<vmem>>, vector<1x384xf32>
    %4 = vector.broadcast %3 : vector<1x384xf32> to vector<16x384xf32>
    %5 = arith.addf %2, %4 : vector<16x384xf32>
    %6 = vector.extract_strided_slice %5 {offsets = [0, 0], sizes = [16, 128], strides = [1, 1]} : vector<16x384xf32> to vector<16x128xf32>
    %c0_5 = arith.constant 0 : index
    %c0_6 = arith.constant 0 : index
    %7 = vector.load %arg4[%c0_5, %c0_6] : memref<16x128xf32, #tpu.memory_space<vmem>>, vector<16x128xf32>
    tpu.vector_store %arg4[%c0_5, %c0_6], %6 {strides = array<i32>} : memref<16x128xf32, #tpu.memory_space<vmem>>, vector<16x128xf32>,
    %8 = vector.extract_strided_slice %5 {offsets = [0, 128], sizes = [16, 128], strides = [1, 1]} : vector<16x384xf32> to vector<16x128xf32>
    %c0_7 = arith.constant 0 : index
    %c0_8 = arith.constant 0 : index
    %9 = vector.load %arg5[%c0_7, %c0_8] : memref<16x128xf32, #tpu.memory_space<vmem>>, vector<16x128xf32>
    tpu.vector_store %arg5[%c0_7, %c0_8], %8 {strides = array<i32>} : memref<16x128xf32, #tpu.memory_space<vmem>>, vector<16x128xf32>,
    %10 = vector.extract_strided_slice %5 {offsets = [0, 256], sizes = [16, 128], strides = [1, 1]} : vector<16x384xf32> to vector<16x128xf32>
    %c0_9 = arith.constant 0 : index
    %c0_10 = arith.constant 0 : index
    %11 = vector.load %arg6[%c0_9, %c0_10] : memref<16x128xf32, #tpu.memory_space<vmem>>, vector<16x128xf32>
    tpu.vector_store %arg6[%c0_9, %c0_10], %10 {strides = array<i32>} : memref<16x128xf32, #tpu.memory_space<vmem>>, vector<16x128xf32>,
    return
  }
  func.func @transform_0(%arg0: i32) -> (i32, i32) {
    %c0_i32 = arith.constant 0 : i32
    %c0_i32_0 = arith.constant 0 : i32
    return %arg0, %c0_i32 : i32, i32
  }
  func.func @transform_1(%arg0: i32) -> (i32, i32) {
    %c0_i32 = arith.constant 0 : i32
    %c0_i32_0 = arith.constant 0 : i32
    %c0_i32_1 = arith.constant 0 : i32
    return %c0_i32, %c0_i32_0 : i32, i32
  }
  func.func @transform_2(%arg0: i32) -> (i32, i32) {
    %c0_i32 = arith.constant 0 : i32
    %c0_i32_0 = arith.constant 0 : i32
    %c0_i32_1 = arith.constant 0 : i32
    return %c0_i32, %c0_i32_0 : i32, i32
  }
  func.func @transform_3(%arg0: i32) -> (i32, i32) {
    %c0_i32 = arith.constant 0 : i32
    %c0_i32_0 = arith.constant 0 : i32
    return %arg0, %c0_i32 : i32, i32
  }
  func.func @transform_4(%arg0: i32) -> (i32, i32) {
    %c0_i32 = arith.constant 0 : i32
    %c0_i32_0 = arith.constant 0 : i32
    return %arg0, %c0_i32 : i32, i32
  }
  func.func @transform_5(%arg0: i32) -> (i32, i32) {
    %c0_i32 = arith.constant 0 : i32
    %c0_i32_0 = arith.constant 0 : i32
    return %arg0, %c0_i32 : i32, i32
  }
}

</mosaic_0001>

<llo_original>
// kernel: tpu_custom_call.1
$region0: #{tpu_custom_call.1}
  #allocation0 [shape = 'u32[]', space=smem, size = 0x4, offset = 0x4, fixed_abs, tag = 'smem constant byte address 0x4 - core index']
  #allocation1 [shape = 'u32[144,128]{1,0:T(1,128)}', space=vmem, size = 0x12000, scoped, tag = 'internal scratch']
  %s0 = inlined_call_operand.hbm [shape: f32[16,32], index: 0, kind: input, shape index: {}]
  %s1 = inlined_call_operand.hbm [shape: f32[32,384], index: 1, kind: input, shape index: {}]
  %s2 = inlined_call_operand.vmem [shape: f32[1,384], index: 2, kind: input, shape index: {}]
  %s3 = inlined_call_operand.hbm [shape: f32[16,128], index: 3, kind: output, shape index: {0}]
  %s4 = inlined_call_operand.hbm [shape: f32[16,128], index: 4, kind: output, shape index: {1}]
  %s5 = inlined_call_operand.hbm [shape: f32[16,128], index: 5, kind: output, shape index: {2}]
  %6 = xla_tuple %s3, %s4, %s5
  %s7 = sld [smem:[#allocation0]]
  $region46: #{tpu_custom_call.1} parent=0
    _
  %s9 = ssub.s32 1, %s7
  %s10 = scalar_select 0, %s9, %s7
  $region1: #{tpu_custom_call.1} parent=0
    #allocation2 [shape = 'u8[8192]{0}', space=vmem, size = 0x2000, scoped, tag = 'input window, operand 0, single buffered']
    #allocation3 [shape = 's32[1]{0}', space=sflag, size = 0x4, scoped, tag = 'scoped memory for tpu_custom_call.1']
    #allocation4 [shape = 's32[1]{0}', space=sflag, size = 0x4, scoped, tag = 'scoped memory for tpu_custom_call.1']
    #allocation5 [shape = 'u8[49152]{0}', space=vmem, size = 0xc000, scoped, tag = 'input window, operand 1, single buffered']
    #allocation6 [shape = 's32[1]{0}', space=sflag, size = 0x4, scoped, tag = 'scoped memory for tpu_custom_call.1']
    #allocation7 [shape = 'u8[8192]{0}', space=vmem, size = 0x2000, scoped, tag = 'output window, operand 0, single buffered']
    #allocation8 [shape = 'u8[8192]{0}', space=vmem, size = 0x2000, scoped, tag = 'output window, operand 1, single buffered']
    #allocation9 [shape = 's32[1]{0}', space=sflag, size = 0x4, scoped, tag = 'scoped memory for tpu_custom_call.1']
    #allocation10 [shape = 'u8[8192]{0}', space=vmem, size = 0x2000, scoped, tag = 'output window, operand 2, single buffered']
    %11 = vsyncpa [#allocation3], 0
    %12 = vsyncpa [#allocation6], 0
    %13 = vsyncpa [#allocation4], 0
    %14 = vsyncpa [#allocation9], 0
    // Predicated region
    $region2: #{tpu_custom_call.1} parent=1 // pred_check
      _
    $region3: #{tpu_custom_call.1} parent=1 // pred_check_branch
      %16 = sbr.rel (0) target = $region5
    $region4: #{tpu_custom_call.1} parent=1 // pred_region
      %s18 = ssub.s32 256, 256
      %19 = vsyncadd [#allocation3], %s18
      %s20 = sshll.u32 [#allocation2], 4
      %s21 = int_to_ptr.vmem [resolvable:$true] %s20
      %26 = dma.hbm_to_vmem [thread:$0]  %s0, 256, %s21, [#allocation3], 128, 128, 8
    $region5: #{tpu_custom_call.1} parent=1 // pred_fallthru
      _
    // Predicated region
    $region6: #{tpu_custom_call.1} parent=1 // pred_check
      _
    $region7: #{tpu_custom_call.1} parent=1 // pred_check_branch
      %28 = sbr.rel (0) target = $region9
    $region8: #{tpu_custom_call.1} parent=1 // pred_region
      %s30 = ssub.s32 1536, 1536
      %31 = vsyncadd [#allocation6], %s30
      %s32 = sshll.u32 [#allocation5], 4
      %s33 = int_to_ptr.vmem [resolvable:$true] %s32
      %38 = dma.hbm_to_vmem [thread:$0]  %s1, 1536, %s33, [#allocation6], 384, 384, 24
    $region9: #{tpu_custom_call.1} parent=1 // pred_fallthru
      _
    // Predicated region
    $region10: #{tpu_custom_call.1} parent=1 // pred_check
      _
    $region11: #{tpu_custom_call.1} parent=1 // pred_check_branch
      %40 = sbr.rel (0) target = $region13
    $region12: #{tpu_custom_call.1} parent=1 // pred_region
      _
    $region13: #{tpu_custom_call.1} parent=1 // pred_fallthru
      _
    // Predicated region
    $region14: #{tpu_custom_call.1} parent=1 // pred_check
      _
    $region15: #{tpu_custom_call.1} parent=1 // pred_check_branch
      %42 = sbr.rel (0) target = $region17
    $region16: #{tpu_custom_call.1} parent=1 // pred_region
      %43 = dma.done [#allocation3], 256
    $region17: #{tpu_custom_call.1} parent=1 // pred_fallthru
      _
    // Predicated region
    $region18: #{tpu_custom_call.1} parent=1 // pred_check
      _
    $region19: #{tpu_custom_call.1} parent=1 // pred_check_branch
      %45 = sbr.rel (0) target = $region21
    $region20: #{tpu_custom_call.1} parent=1 // pred_region
      %46 = dma.done [#allocation6], 1536
    $region21: #{tpu_custom_call.1} parent=1 // pred_fallthru
      _
    %v47 = vld [vmem:[#allocation2] sm:$0xff]
    %v48 = vld [vmem:[#allocation2 + $0x8] sm:$0xff]
    %v49 = vld [vmem:[#allocation5] sm:$0xff]
    %v50 = vld [vmem:[#allocation5 + $0x8] sm:$0xff]
    %v51 = vld [vmem:[#allocation5 + $0x10] sm:$0xff]
    %v52 = vld [vmem:[#allocation5 + $0x18] sm:$0xff]
    %v53 = vld [vmem:[#allocation5 + $0x20] sm:$0xff]
    %v54 = vld [vmem:[#allocation5 + $0x28] sm:$0xff]
    %v55 = vld [vmem:[#allocation5 + $0x30] sm:$0xff]
    %v56 = vld [vmem:[#allocation5 + $0x38] sm:$0xff]
    %v57 = vld [vmem:[#allocation5 + $0x40] sm:$0xff]
    %v58 = vld [vmem:[#allocation5 + $0x48] sm:$0xff]
    %v59 = vld [vmem:[#allocation5 + $0x50] sm:$0xff]
    %v60 = vld [vmem:[#allocation5 + $0x58] sm:$0xff]
    %v61 = vld [vmem:[%s2] sm:$0x7]
    %v63 = vlaneseq
    %v64 = vshrl.u32 %v63, 7
    %v65 = vsub.s32 0, %v64
    %v66 = vrot.slane %v61, %v65
    %v67 = vlaneseq
    %v68 = vshrl.u32 %v67, 7
    %v69 = vsub.s32 1, %v68
    %v70 = vrot.slane %v61, %v69
    %v71 = vlaneseq
    %v72 = vshrl.u32 %v71, 7
    %v73 = vsub.s32 2, %v72
    %v74 = vrot.slane %v61, %v73
    %vm78 = vcmask 261120
    %v80 = vsel %vm78, %v47, 0
    %v83 = vsel %vm78, %v48, 0
    %85 = vmatprep.subr.mxu0 %v50
    %86 = vmatpush1.msra.mxu0 %v49
    %87 = vmatprep.subr.mxu0 %v53
    %88 = vmatpush1.msra.mxu0 %v52
    %89 = vmatprep.subr.mxu0 %v56
    %90 = vmatpush1.msra.mxu0 %v55
    %91 = vmatprep.subr.mxu0 %v59
    %92 = vmatpush1.msra.mxu0 %v58
    %93 = vmatprep.subr.mxu0 0.0
    %94 = vmatpush1.msra.mxu0 0.0
    %95 = vmatprep.subr.mxu0 0.0
    %96 = vmatpush1.msra.mxu0 0.0
    %97 = vmatprep.subr.mxu0 0.0
    %98 = vmatpush1.msra.mxu0 0.0
    %99 = vmatprep.subr.mxu0 0.0
    %100 = vmatpush1.msra.mxu0 0.0
    %101 = vmatprep.subr.mxu0 0.0
    %102 = vmatpush1.msra.mxu0 0.0
    %103 = vmatprep.subr.mxu0 0.0
    %104 = vmatpush1.msra.mxu0 0.0
    %105 = vmatprep.subr.mxu0 0.0
    %106 = vmatpush1.msra.mxu0 0.0
    %107 = vmatprep.subr.mxu0 0.0
    %108 = vmatpush1.msra.mxu0 0.0
    %109 = vmatprep.subr.mxu0 0.0
    %110 = vmatpush1.msra.mxu0 0.0
    %111 = vmatprep.subr.mxu0 0.0
    %112 = vmatpush1.msra.mxu0 0.0
    %113 = vmatprep.subr.mxu0 0.0
    %114 = vmatpush1.msra.mxu0 0.0
    %115 = vmatprep.subr.mxu0 0.0
    %116 = vmatpush1.msra.mxu0 0.0
    %117 = vmatprep.subr.mxu0 0.0
    %118 = vmatpush1.msra.mxu0 0.0
    %119 = vmatprep.subr.mxu0 0.0
    %120 = vmatpush1.msra.mxu0 0.0
    %121 = vmatprep.subr.mxu0 0.0
    %122 = vmatpush1.msra.mxu0 0.0
    %123 = vmatprep.subr.mxu0 0.0
    %124 = vmatpush1.msra.mxu0 0.0
    %125 = vmatprep.subr.mxu0 0.0
    %126 = vmatpush1.msra.mxu0 0.0
    %127 = vmatprep.subr.mxu0 0.0
    %128 = vmatpush1.msra.mxu0 0.0
    %129 = vmatprep.subr.mxu0 0.0
    %130 = vmatpush1.msra.mxu0 0.0
    %131 = vmatprep.subr.mxu0 0.0
    %132 = vmatpush1.msra.mxu0 0.0
    %133 = vmatprep.subr.mxu0 0.0
    %134 = vmatpush1.msra.mxu0 0.0
    %135 = vmatprep.subr.mxu0 0.0
    %136 = vmatpush1.msra.mxu0 0.0
    %137 = vmatprep.subr.mxu0 0.0
    %138 = vmatpush1.msra.mxu0 0.0
    %139 = vmatprep.subr.mxu0 0.0
    %140 = vmatpush1.msra.mxu0 0.0
    %141 = vmatprep.subr.mxu0 0.0
    %142 = vmatpush1.msra.mxu0 0.0
    %143 = vmatprep.subr.mxu0 0.0
    %144 = vmatpush1.msra.mxu0 0.0
    %145 = vmatprep.subr.mxu0 0.0
    %146 = vmatpush1.msra.mxu0 0.0
    %147 = vmatprep.subr.mxu0 0.0
    %148 = vmatpush1.msra.mxu0 0.0
    %149 = vmatprep.mubr.f32.mxu0 0.0
    %150 = vmatmul.mubr.f32.gmra.mrb[0].mxu0 %v80
    %v151 = vpop.f32.mrb[0].mxu0
    %v152 = vadd.f32 %v66, %v151
    %v153 = vpop.f32.mrb[0].mxu0
    %v154 = vadd.f32 %v70, %v153
    %155 = vmatprep.mubr.f32.mxu0 0.0
    %156 = vmatmul.mubr.f32.gmra.mrb[0].mxu0 %v83
    %v157 = vpop.f32.mrb[0].mxu0
    %v158 = vadd.f32 %v66, %v157
    %v159 = vpop.f32.mrb[0].mxu0
    %v160 = vadd.f32 %v70, %v159
    %161 = vdwg.mxu0
    %162 = vmatprep.subr.mxu0 0.0
    %163 = vmatpush1.msra.mxu0 %v51
    %164 = vmatprep.subr.mxu0 0.0
    %165 = vmatpush1.msra.mxu0 %v54
    %166 = vmatprep.subr.mxu0 0.0
    %167 = vmatpush1.msra.mxu0 %v57
    %168 = vmatprep.subr.mxu0 0.0
    %169 = vmatpush1.msra.mxu0 %v60
    %170 = vmatprep.subr.mxu0 0.0
    %171 = vmatpush1.msra.mxu0 0.0
    %172 = vmatprep.subr.mxu0 0.0
    %173 = vmatpush1.msra.mxu0 0.0
    %174 = vmatprep.subr.mxu0 0.0
    %175 = vmatpush1.msra.mxu0 0.0
    %176 = vmatprep.subr.mxu0 0.0
    %177 = vmatpush1.msra.mxu0 0.0
    %178 = vmatprep.subr.mxu0 0.0
    %179 = vmatpush1.msra.mxu0 0.0
    %180 = vmatprep.subr.mxu0 0.0
    %181 = vmatpush1.msra.mxu0 0.0
    %182 = vmatprep.subr.mxu0 0.0
    %183 = vmatpush1.msra.mxu0 0.0
    %184 = vmatprep.subr.mxu0 0.0
    %185 = vmatpush1.msra.mxu0 0.0
    %186 = vmatprep.subr.mxu0 0.0
    %187 = vmatpush1.msra.mxu0 0.0
    %188 = vmatprep.subr.mxu0 0.0
    %189 = vmatpush1.msra.mxu0 0.0
    %190 = vmatprep.subr.mxu0 0.0
    %191 = vmatpush1.msra.mxu0 0.0
    %192 = vmatprep.subr.mxu0 0.0
    %193 = vmatpush1.msra.mxu0 0.0
    %194 = vmatprep.subr.mxu0 0.0
    %195 = vmatpush1.msra.mxu0 0.0
    %196 = vmatprep.subr.mxu0 0.0
    %197 = vmatpush1.msra.mxu0 0.0
    %198 = vmatprep.subr.mxu0 0.0
    %199 = vmatpush1.msra.mxu0 0.0
    %200 = vmatprep.subr.mxu0 0.0
    %201 = vmatpush1.msra.mxu0 0.0
    %202 = vmatprep.subr.mxu0 0.0
    %203 = vmatpush1.msra.mxu0 0.0
    %204 = vmatprep.subr.mxu0 0.0
    %205 = vmatpush1.msra.mxu0 0.0
    %206 = vmatprep.subr.mxu0 0.0
    %207 = vmatpush1.msra.mxu0 0.0
    %208 = vmatprep.subr.mxu0 0.0
    %209 = vmatpush1.msra.mxu0 0.0
    %210 = vmatprep.subr.mxu0 0.0
    %211 = vmatpush1.msra.mxu0 0.0
    %212 = vmatprep.subr.mxu0 0.0
    %213 = vmatpush1.msra.mxu0 0.0
    %214 = vmatprep.subr.mxu0 0.0
    %215 = vmatpush1.msra.mxu0 0.0
    %216 = vmatprep.subr.mxu0 0.0
    %217 = vmatpush1.msra.mxu0 0.0
    %218 = vmatprep.subr.mxu0 0.0
    %219 = vmatpush1.msra.mxu0 0.0
    %220 = vmatprep.subr.mxu0 0.0
    %221 = vmatpush1.msra.mxu0 0.0
    %222 = vmatprep.subr.mxu0 0.0
    %223 = vmatpush1.msra.mxu0 0.0
    %224 = vmatprep.subr.mxu0 0.0
    %225 = vmatpush1.msra.mxu0 0.0
    %226 = vmatprep.mubr.f32.mxu0 0.0
    %227 = vmatmul.mubr.f32.gmra.mrb[0].mxu0 %v80
    %v228 = vpop.f32.mrb[0].mxu0
    %v229 = vadd.f32 %v74, %v228
    %v230 = vpop.f32.mrb[0].mxu0
    %231 = vmatprep.mubr.f32.mxu0 0.0
    %232 = vmatmul.mubr.f32.gmra.mrb[0].mxu0 %v83
    %v233 = vpop.f32.mrb[0].mxu0
    %v234 = vadd.f32 %v74, %v233
    %v235 = vpop.f32.mrb[0].mxu0
    %236 = vdwg.mxu0
    %237 = vst [vmem:[#allocation7] sm:$0xff] %v152
    %238 = vst [vmem:[#allocation7 + $0x8] sm:$0xff] %v158
    %239 = vst [vmem:[#allocation8] sm:$0xff] %v154
    %240 = vst [vmem:[#allocation8 + $0x8] sm:$0xff] %v160
    %241 = vst [vmem:[#allocation10] sm:$0xff] %v229
    %242 = vst [vmem:[#allocation10 + $0x8] sm:$0xff] %v234
    // Predicated region
    $region22: #{tpu_custom_call.1} parent=1 // pred_check
      _
    $region23: #{tpu_custom_call.1} parent=1 // pred_check_branch
      %244 = sbr.rel (0) target = $region25
    $region24: #{tpu_custom_call.1} parent=1 // pred_region
      %s246 = ssub.s32 256, 256
      %247 = vsyncadd [#allocation4], %s246
      %s248 = sshll.u32 [#allocation7], 4
      %s249 = int_to_ptr.vmem [resolvable:$true] %s248
      %254 = dma.vmem_to_hbm [thread:$0]  %s249, 256, %s3, [#allocation4], 128, 128, 8
    $region25: #{tpu_custom_call.1} parent=1 // pred_fallthru
      _
    // Predicated region
    $region26: #{tpu_custom_call.1} parent=1 // pred_check
      _
    $region27: #{tpu_custom_call.1} parent=1 // pred_check_branch
      %256 = sbr.rel (0) target = $region29
    $region28: #{tpu_custom_call.1} parent=1 // pred_region
      %s258 = ssub.s32 256, 256
      %259 = vsyncadd [#allocation9], %s258
      %s260 = sshll.u32 [#allocation8], 4
      %s261 = int_to_ptr.vmem [resolvable:$true] %s260
      %266 = dma.vmem_to_hbm [thread:$0]  %s261, 256, %s4, [#allocation9], 128, 128, 8
    $region29: #{tpu_custom_call.1} parent=1 // pred_fallthru
      _
    // Predicated region
    $region30: #{tpu_custom_call.1} parent=1 // pred_check
      _
    $region31: #{tpu_custom_call.1} parent=1 // pred_check_branch
      %268 = sbr.rel (0) target = $region33
    $region32: #{tpu_custom_call.1} parent=1 // pred_region
      %s270 = ssub.s32 256, 256
      %271 = vsyncadd [#allocation9], %s270
      %s272 = sshll.u32 [#allocation10], 4
      %s273 = int_to_ptr.vmem [resolvable:$true] %s272
      %278 = dma.vmem_to_hbm [thread:$0]  %s273, 256, %s5, [#allocation9], 128, 128, 8
    $region33: #{tpu_custom_call.1} parent=1 // pred_fallthru
      _
    // Predicated region
    $region34: #{tpu_custom_call.1} parent=1 // pred_check
      _
    $region35: #{tpu_custom_call.1} parent=1 // pred_check_branch
      %280 = sbr.rel (0) target = $region37
    $region36: #{tpu_custom_call.1} parent=1 // pred_region
      %281 = dma.done [#allocation4], 256
    $region37: #{tpu_custom_call.1} parent=1 // pred_fallthru
      _
    // Predicated region
    $region38: #{tpu_custom_call.1} parent=1 // pred_check
      _
    $region39: #{tpu_custom_call.1} parent=1 // pred_check_branch
      %283 = sbr.rel (0) target = $region41
    $region40: #{tpu_custom_call.1} parent=1 // pred_region
      %284 = dma.done [#allocation9], 256
    $region41: #{tpu_custom_call.1} parent=1 // pred_fallthru
      _
    // Predicated region
    $region42: #{tpu_custom_call.1} parent=1 // pred_check
      _
    $region43: #{tpu_custom_call.1} parent=1 // pred_check_branch
      %286 = sbr.rel (0) target = $region45
    $region44: #{tpu_custom_call.1} parent=1 // pred_region
      %287 = dma.done [#allocation9], 256
    $region45: #{tpu_custom_call.1} parent=1 // pred_fallthru
      _
    %288 = vsyncpa [#allocation3], 1
    %289 = vsyncpa [#allocation6], 1
    %290 = vsyncpa [#allocation4], 1
    %291 = vsyncpa [#allocation9], 1

</llo_original>
